<compile_context>
chip_gen: v7x
topology: tpu7x:2x2x1
jax: 0.10.0
libtpu: 0.0.40
codegen_flags: <defaults>
</compile_context>

<pallas_src>
import jax
import jax.numpy as jnp
from jax.experimental import pallas as pl
from jax.experimental.pallas import tpu as pltpu

EPS = 1e-5


def _adain1d_norm_kernel(x_ref, g_ref, b_ref, o_ref):
    # x_ref: (Bblk, Ct, T), g_ref/b_ref: (Bblk, Ct, 1), o_ref: (Bblk, Ct, T)
    x = x_ref[...].astype(jnp.float32)
    gamma = g_ref[...].astype(jnp.float32)
    beta = b_ref[...].astype(jnp.float32)

    # InstanceNorm1d (affine=False): per-(b, c) stats over T, biased var.
    mean = jnp.mean(x, axis=-1, keepdims=True)          # (Bblk, Ct, 1)
    xc = x - mean                                        # reused (single pass)
    var = jnp.mean(xc * xc, axis=-1, keepdims=True)      # (Bblk, Ct, 1)

    # Fold (1 + gamma) * xn + beta into one mul + add per (C, T) element.
    scale = (1.0 + gamma) * jax.lax.rsqrt(var + EPS)     # (Bblk, Ct, 1)
    o_ref[...] = (xc * scale + beta).astype(o_ref.dtype)


def _choose_tiles(B, C, T, itemsize, target_bytes):
    """Pick (batch_block, channel_tile); never tile T."""
    row_bytes = T * max(itemsize, 4)          # per-(b, c) row, sized as f32
    if C * row_bytes <= target_bytes:
        tc = C                                # full channel extent
        bblk = max(1, min(B, target_bytes // (C * row_bytes)))
    else:
        bblk = 1
        tc = max(8, (target_bytes // row_bytes) // 8 * 8)   # sublane multiple
        tc = min(tc, C)
    return bblk, tc


def adain1d(x, s, w, b, *, target_block_bytes=4 << 20,
            vmem_limit_bytes=48 << 20):
    """x: (B, C, T), s: (B, S), w: (2C, S), b: (2C,). Returns (B, C, T)."""
    B, C, T = x.shape

    # nn.Linear hoisted to one batched XLA GEMM (no tiny per-step MXU matmul).
    h = (s.astype(jnp.float32) @ w.astype(jnp.float32).T
         + b.astype(jnp.float32))                         # (B, 2C)
    gamma = h[:, :C].reshape(B, C, 1)                     # (B, C, 1)
    beta = h[:, C:].reshape(B, C, 1)                      # (B, C, 1)

    bblk, tc = _choose_tiles(B, C, T, x.dtype.itemsize, target_block_bytes)
    grid = (pl.cdiv(B, bblk), pl.cdiv(C, tc))

    return pl.pallas_call(
        _adain1d_norm_kernel,
        out_shape=jax.ShapeDtypeStruct((B, C, T), x.dtype),
        grid_spec=pltpu.PrefetchScalarGridSpec(
            num_scalar_prefetch=0,
            grid=grid,
            in_specs=[
                pl.BlockSpec((bblk, tc, T), lambda i, j: (i, j, 0)),
                pl.BlockSpec((bblk, tc, 1), lambda i, j: (i, j, 0)),
                pl.BlockSpec((bblk, tc, 1), lambda i, j: (i, j, 0)),
            ],
            out_specs=pl.BlockSpec((bblk, tc, T), lambda i, j: (i, j, 0)),
        ),
        compiler_params=pltpu.CompilerParams(
            dimension_semantics=("parallel", "parallel"),
            vmem_limit_bytes=vmem_limit_bytes,
        ),
    )(x, gamma, beta)


def adain1d_ref(x, s, w, b):
    """Pure-JAX reference mirroring the PyTorch module."""
    h = s @ w.T + b                            # (B, 2C)
    C = x.shape[1]
    gamma = h[:, :C][:, :, None]               # (B, C, 1)
    beta = h[:, C:][:, :, None]                # (B, C, 1)
    mean = jnp.mean(x, axis=-1, keepdims=True)
    var = jnp.mean((x - mean) ** 2, axis=-1, keepdims=True)
    xn = (x - mean) / jnp.sqrt(var + EPS)
    return (1.0 + gamma) * xn + beta


def _make_inputs(key, B, C, T, S):
    kx, ks, kw, kb = jax.random.split(key, 4)
    x = jax.random.normal(kx, (B, C, T), dtype=jnp.float32)
    s = jax.random.normal(ks, (B, S), dtype=jnp.float32)
    # torch's default Linear init: uniform(-1/sqrt(S), 1/sqrt(S))
    bound = 1.0 / (S ** 0.5)
    w = jax.random.uniform(kw, (2 * C, S), minval=-bound, maxval=bound,
                           dtype=jnp.float32)
    b = jax.random.uniform(kb, (2 * C,), minval=-bound, maxval=bound,
                           dtype=jnp.float32)
    return x, s, w, b


if __name__ == "__main__":
    key = jax.random.PRNGKey(0)
    k1, k2 = jax.random.split(key)

    # Case 1: small module-like shapes; whole problem fits one block (grid 1x1).
    B, C, T, S = 2, 8, 128, 16
    x, s, w, b = _make_inputs(k1, B, C, T, S)
    out = jax.block_until_ready(adain1d(x, s, w, b))
    ref = adain1d_ref(x, s, w, b)
    assert out.shape == (B, C, T)
    assert jnp.allclose(out, ref, atol=1e-4, rtol=1e-4), "mismatch (case 1)"

    # Case 2: force a multi-step (batch x channel-tile) grid to exercise tiling.
    B2, C2, T2, S2 = 2, 16, 256, 16
    x2, s2, w2, b2 = _make_inputs(k2, B2, C2, T2, S2)
    out2 = jax.block_until_ready(
        adain1d(x2, s2, w2, b2, target_block_bytes=8 * 1024))
    ref2 = adain1d_ref(x2, s2, w2, b2)
    assert out2.shape == (B2, C2, T2)
    assert jnp.allclose(out2, ref2, atol=1e-4, rtol=1e-4), "mismatch (case 2)"

    print("KERNEL_OK")
</pallas_src>

<mosaic_0001>
module attributes {stable_mosaic.version = 11 : i64} {
  func.func @_adain1d_norm_kernel(%arg0: i32, %arg1: i32, %arg2: memref<2x8x128xf32, #tpu.memory_space<vmem>>, %arg3: memref<2x8x1xf32, #tpu.memory_space<vmem>>, %arg4: memref<2x8x1xf32, #tpu.memory_space<vmem>>, %arg5: memref<2x8x128xf32, #tpu.memory_space<vmem>>) attributes {dimension_semantics = [#tpu.dimension_semantics<parallel>, #tpu.dimension_semantics<parallel>], iteration_bounds = array<i64: 1, 1>, scalar_prefetch = 0 : i64, scratch_operands = 0 : i64, tpu.core_type = #tpu.core_type<tc>, window_params = [{transform_indices = @transform_0, window_bounds = array<i64: 2, 8, 128>}, {transform_indices = @transform_1, window_bounds = array<i64: 2, 8, 1>}, {transform_indices = @transform_2, window_bounds = array<i64: 2, 8, 1>}, {transform_indices = @transform_3, window_bounds = array<i64: 2, 8, 128>}]} {
    %c0 = arith.constant 0 : index
    %c0_0 = arith.constant 0 : index
    %c0_1 = arith.constant 0 : index
    %0 = vector.load %arg2[%c0, %c0_0, %c0_1] : memref<2x8x128xf32, #tpu.memory_space<vmem>>, vector<2x8x128xf32>
    %c0_2 = arith.constant 0 : index
    %c0_3 = arith.constant 0 : index
    %c0_4 = arith.constant 0 : index
    %1 = vector.load %arg3[%c0_2, %c0_3, %c0_4] : memref<2x8x1xf32, #tpu.memory_space<vmem>>, vector<2x8x1xf32>
    %c0_5 = arith.constant 0 : index
    %c0_6 = arith.constant 0 : index
    %c0_7 = arith.constant 0 : index
    %2 = vector.load %arg4[%c0_5, %c0_6, %c0_7] : memref<2x8x1xf32, #tpu.memory_space<vmem>>, vector<2x8x1xf32>
    %cst = arith.constant dense<0.000000e+00> : vector<2x8xf32>
    %3 = vector.multi_reduction <add>, %0, %cst [2] : vector<2x8x128xf32> to vector<2x8xf32>
    %4 = vector.shape_cast %3 : vector<2x8xf32> to vector<2x8x1xf32>
    %cst_8 = arith.constant 1.280000e+02 : f32
    %5 = vector.broadcast %cst_8 : f32 to vector<2x8x1xf32>
    %6 = arith.divf %4, %5 : vector<2x8x1xf32>
    %7 = vector.broadcast %6 : vector<2x8x1xf32> to vector<2x8x128xf32>
    %8 = arith.subf %0, %7 : vector<2x8x128xf32>
    %9 = arith.mulf %8, %8 : vector<2x8x128xf32>
    %cst_9 = arith.constant dense<0.000000e+00> : vector<2x8xf32>
    %10 = vector.multi_reduction <add>, %9, %cst_9 [2] : vector<2x8x128xf32> to vector<2x8xf32>
    %11 = vector.shape_cast %10 : vector<2x8xf32> to vector<2x8x1xf32>
    %cst_10 = arith.constant 1.280000e+02 : f32
    %12 = vector.broadcast %cst_10 : f32 to vector<2x8x1xf32>
    %13 = arith.divf %11, %12 : vector<2x8x1xf32>
    %cst_11 = arith.constant 1.000000e+00 : f32
    %14 = vector.broadcast %cst_11 : f32 to vector<2x8x1xf32>
    %15 = arith.addf %14, %1 : vector<2x8x1xf32>
    %cst_12 = arith.constant 9.99999974E-6 : f32
    %16 = vector.broadcast %cst_12 : f32 to vector<2x8x1xf32>
    %17 = arith.addf %13, %16 : vector<2x8x1xf32>
    %18 = math.rsqrt %17 : vector<2x8x1xf32>
    %19 = arith.mulf %15, %18 : vector<2x8x1xf32>
    %20 = vector.broadcast %19 : vector<2x8x1xf32> to vector<2x8x128xf32>
    %21 = arith.mulf %8, %20 : vector<2x8x128xf32>
    %22 = vector.broadcast %2 : vector<2x8x1xf32> to vector<2x8x128xf32>
    %23 = arith.addf %21, %22 : vector<2x8x128xf32>
    %c0_13 = arith.constant 0 : index
    %c0_14 = arith.constant 0 : index
    %c0_15 = arith.constant 0 : index
    %24 = vector.load %arg5[%c0_13, %c0_14, %c0_15] : memref<2x8x128xf32, #tpu.memory_space<vmem>>, vector<2x8x128xf32>
    tpu.vector_store %arg5[%c0_13, %c0_14, %c0_15], %23 {strides = array<i32>} : memref<2x8x128xf32, #tpu.memory_space<vmem>>, vector<2x8x128xf32>,
    return
  }
  func.func @transform_0(%arg0: i32, %arg1: i32) -> (i32, i32, i32) {
    %c0_i32 = arith.constant 0 : i32
    %c0_i32_0 = arith.constant 0 : i32
    return %arg0, %arg1, %c0_i32 : i32, i32, i32
  }
  func.func @transform_1(%arg0: i32, %arg1: i32) -> (i32, i32, i32) {
    %c0_i32 = arith.constant 0 : i32
    %c0_i32_0 = arith.constant 0 : i32
    return %arg0, %arg1, %c0_i32 : i32, i32, i32
  }
  func.func @transform_2(%arg0: i32, %arg1: i32) -> (i32, i32, i32) {
    %c0_i32 = arith.constant 0 : i32
    %c0_i32_0 = arith.constant 0 : i32
    return %arg0, %arg1, %c0_i32 : i32, i32, i32
  }
  func.func @transform_3(%arg0: i32, %arg1: i32) -> (i32, i32, i32) {
    %c0_i32 = arith.constant 0 : i32
    %c0_i32_0 = arith.constant 0 : i32
    return %arg0, %arg1, %c0_i32 : i32, i32, i32
  }
}

</mosaic_0001>

<llo_original>
// kernel: tpu_custom_call.1
$region0: #{tpu_custom_call.1}
  #allocation0 [shape = 'u32[]', space=smem, size = 0x4, offset = 0x4, fixed_abs, tag = 'smem constant byte address 0x4 - core index']
  #allocation1 [shape = 'u32[144,128]{1,0:T(1,128)}', space=vmem, size = 0x12000, scoped, tag = 'internal scratch']
  %s0 = inlined_call_operand.vmem [shape: f32[2,8,128], index: 0, kind: input, shape index: {}]
  %s1 = inlined_call_operand.vmem [shape: f32[2,8,1], index: 1, kind: input, shape index: {}]
  %s2 = inlined_call_operand.vmem [shape: f32[2,8,1], index: 2, kind: input, shape index: {}]
  %s3 = inlined_call_operand.hbm [shape: f32[2,8,128], index: 3, kind: output, shape index: {}]
  %s4 = sld [smem:[#allocation0]]
  $region22: #{tpu_custom_call.1} parent=0
    _
  %s6 = ssub.s32 1, %s4
  %s7 = scalar_select 0, %s6, %s4
  $region1: #{tpu_custom_call.1} parent=0
    #allocation2 [shape = 'u8[8192]{0}', space=vmem, size = 0x2000, scoped, tag = 'output window, operand 0, single buffered']
    #allocation3 [shape = 's32[1]{0}', space=sflag, size = 0x4, scoped, tag = 'scoped memory for tpu_custom_call.1']
    %8 = vsyncpa [#allocation3], 0
    // Predicated region
    $region2: #{tpu_custom_call.1} parent=1 // pred_check
      _
    $region3: #{tpu_custom_call.1} parent=1 // pred_check_branch
      %10 = sbr.rel (0) target = $region5
    $region4: #{tpu_custom_call.1} parent=1 // pred_region
      _
    $region5: #{tpu_custom_call.1} parent=1 // pred_fallthru
      _
    // Predicated region
    $region6: #{tpu_custom_call.1} parent=1 // pred_check
      _
    $region7: #{tpu_custom_call.1} parent=1 // pred_check_branch
      %12 = sbr.rel (0) target = $region9
    $region8: #{tpu_custom_call.1} parent=1 // pred_region
      _
    $region9: #{tpu_custom_call.1} parent=1 // pred_fallthru
      _
    // Predicated region
    $region10: #{tpu_custom_call.1} parent=1 // pred_check
      _
    $region11: #{tpu_custom_call.1} parent=1 // pred_check_branch
      %14 = sbr.rel (0) target = $region13
    $region12: #{tpu_custom_call.1} parent=1 // pred_region
      _
    $region13: #{tpu_custom_call.1} parent=1 // pred_fallthru
      _
    %v15 = vld [vmem:[%s0] sm:$0xff]
    %v16 = vld [vmem:[%s0 + $0x8] sm:$0xff]
    %v17 = vld [vmem:[%s1] sm:$0xff]
    %v18 = vld [vmem:[%s1 + $0x8] sm:$0xff]
    %v19 = vld [vmem:[%s2] sm:$0xff]
    %v20 = vld [vmem:[%s2 + $0x8] sm:$0xff]
    %21 = vadd.xlane.f32.xlu0 %v15
    %v22 = vpop.xlane.xlu0 %21
    %23 = vadd.xlane.f32.xlu0 %v16
    %v24 = vpop.xlane.xlu0 %23
    %v25 = vrcp.pop 128.0
    %v26 = vmul.f32 %v22, %v25
    %v27 = vmul.f32 %v24, %v25
    %v28 = vsub.f32 %v15, %v26
    %v29 = vsub.f32 %v16, %v27
    %v30 = vmul.f32 %v28, %v28
    %v31 = vmul.f32 %v29, %v29
    %32 = vadd.xlane.f32.xlu0 %v30
    %v33 = vpop.xlane.xlu0 %32
    %34 = vadd.xlane.f32.xlu0 %v31
    %v35 = vpop.xlane.xlu0 %34
    %v36 = vmul.f32 %v33, %v25
    %v37 = vmul.f32 %v35, %v25
    %v38 = vadd.f32 %v17, 1.0
    %v39 = vadd.f32 %v18, 1.0
    %v40 = vadd.f32 %v36, 1e-05
    %v41 = vadd.f32 %v37, 1e-05
    %v42 = vrsqrt.pop %v40
    %v43 = vrsqrt.pop %v41
    %v44 = vmul.f32 %v38, %v42
    %v45 = vmul.f32 %v39, %v43
    %47 = vset.pattern.permute.xlu0 0
    %48 = vperm.xlu0 %47, %v44
    %v49 = vpop.permute.xlu0 %48
    %52 = vset.pattern.permute.xlu0 0
    %53 = vperm.xlu0 %52, %v45
    %v54 = vpop.permute.xlu0 %53
    %v56 = vmul.f32 %v28, %v49
    %v57 = vmul.f32 %v29, %v54
    %59 = vset.pattern.permute.xlu0 0
    %60 = vperm.xlu0 %59, %v19
    %v61 = vpop.permute.xlu0 %60
    %64 = vset.pattern.permute.xlu0 0
    %65 = vperm.xlu0 %64, %v20
    %v66 = vpop.permute.xlu0 %65
    %v68 = vadd.f32 %v56, %v61
    %v69 = vadd.f32 %v57, %v66
    %70 = vst [vmem:[#allocation2] sm:$0xff] %v68
    %71 = vst [vmem:[#allocation2 + $0x8] sm:$0xff] %v69
    // Predicated region
    $region14: #{tpu_custom_call.1} parent=1 // pred_check
      _
    $region15: #{tpu_custom_call.1} parent=1 // pred_check_branch
      %73 = sbr.rel (0) target = $region17
    $region16: #{tpu_custom_call.1} parent=1 // pred_region
      %s75 = ssub.s32 256, 256
      %76 = vsyncadd [#allocation3], %s75
      %s77 = sshll.u32 [#allocation2], 4
      %s78 = int_to_ptr.vmem [resolvable:$true] %s77
      %83 = dma.vmem_to_hbm [thread:$0]  %s78, 256, %s3, [#allocation3], 128, 128, 8
    $region17: #{tpu_custom_call.1} parent=1 // pred_fallthru
      _
    // Predicated region
    $region18: #{tpu_custom_call.1} parent=1 // pred_check
      _
    $region19: #{tpu_custom_call.1} parent=1 // pred_check_branch
      %85 = sbr.rel (0) target = $region21
    $region20: #{tpu_custom_call.1} parent=1 // pred_region
      %86 = dma.done [#allocation3], 256
    $region21: #{tpu_custom_call.1} parent=1 // pred_fallthru
      _
    %87 = vsyncpa [#allocation3], 1

</llo_original>
